<compile_context>
chip_gen: v6e
topology: v6e:2x2x1
jax: 0.10.0
libtpu: 0.0.40
codegen_flags: <defaults>
</compile_context>

<pallas_src>
import jax
import jax.numpy as jnp
from jax.experimental import pallas as pl
from jax.experimental.pallas import tpu as pltpu


def linear_sigmoid_kernel(xt_ref, w_ref, b_ref, o_ref):
    # xt_ref: (F, TB) VMEM  -- input transposed, batch along lanes
    # w_ref : (F, 1)  VMEM  -- weight column, resident across the grid
    # b_ref : (1,)    SMEM  -- bias scalar
    # o_ref : (1, TB) VMEM  -- lane-dense output row
    xt = xt_ref[...]
    w = w_ref[...]
    b = b_ref[0]
    # VPU multiply + sublane reduce over F (avoids a 1-result-column MXU pass).
    pred = jnp.sum(xt * w, axis=0, keepdims=True) + b          # (1, TB) f32
    # exp lands on the EUP; exact sigmoid for parity with the reference.
    out = 1.0 / (1.0 + jnp.exp(-pred))
    o_ref[...] = out.astype(o_ref.dtype)


def my_model_forward(x, w, b, *, lane_tile=512):
    """Forward of MyModel: sigmoid(x @ w.T + b).

    x: (B, F) f32, w: (1, F) f32 (torch Linear layout), b: (1,) f32.
    Returns (B, 1) f32.
    """
    B, F = x.shape
    if B <= lane_tile:
        tb, Bp = B, B                    # single full-array block (no (8,128) constraint)
    else:
        tb = lane_tile                   # multiple of 128 -> legal lane tile
        Bp = pl.cdiv(B, tb) * tb
        if Bp != B:
            x = jnp.pad(x, ((0, Bp - B), (0, 0)))

    xt = x.T                             # (F, Bp): batch along lanes (lane-dense output slab)
    w_col = w.T                          # (F, 1)

    out = pl.pallas_call(
        linear_sigmoid_kernel,
        out_shape=jax.ShapeDtypeStruct((1, Bp), x.dtype),
        grid_spec=pltpu.PrefetchScalarGridSpec(
            num_scalar_prefetch=0,
            grid=(Bp // tb,),
            in_specs=[
                pl.BlockSpec((F, tb), lambda i: (0, i)),            # x^T batch tile
                pl.BlockSpec((F, 1), lambda i: (0, 0)),             # weight (resident)
                pl.BlockSpec(memory_space=pltpu.MemorySpace.SMEM),  # bias scalar in SMEM
            ],
            out_specs=pl.BlockSpec((1, tb), lambda i: (0, i)),
        ),
        compiler_params=pltpu.CompilerParams(
            dimension_semantics=("parallel",),          # batch tiles are independent
            vmem_limit_bytes=32 * 1024 * 1024,          # explicit budget, safe on v7x
        ),
    )(xt, w_col, b)

    return out[0, :B].reshape(B, 1)


if __name__ == "__main__":
    batch = 8
    in_features = 32

    key = jax.random.PRNGKey(0)
    kx, kw, kb = jax.random.split(key, 3)

    x = jax.random.normal(kx, (batch, in_features), dtype=jnp.float32)

    # torch.nn.Linear(in_features, 1) init: U(-1/sqrt(F), 1/sqrt(F))
    bound = 1.0 / jnp.sqrt(jnp.float32(in_features))
    w = jax.random.uniform(kw, (1, in_features), jnp.float32, -bound, bound)  # (out=1, in)
    b = jax.random.uniform(kb, (1,), jnp.float32, -bound, bound)

    out = jax.block_until_ready(my_model_forward(x, w, b))
    ref = jax.nn.sigmoid(x @ w.T + b)
    assert out.shape == (batch, 1)
    assert jnp.allclose(out, ref, atol=1e-6, rtol=1e-6)

    # Also exercise the batch-tiled, multi-block lane-dense path.
    xb = jax.random.normal(kx, (1024, in_features), dtype=jnp.float32)
    outb = jax.block_until_ready(my_model_forward(xb, w, b))
    refb = jax.nn.sigmoid(xb @ w.T + b)
    assert outb.shape == (1024, 1)
    assert jnp.allclose(outb, refb, atol=1e-6, rtol=1e-6)

    print("KERNEL_OK")
</pallas_src>

<mosaic_0001>
module attributes {stable_mosaic.version = 11 : i64} {
  func.func @linear_sigmoid_kernel(%arg0: i32, %arg1: memref<32x8xf32, #tpu.memory_space<vmem>>, %arg2: memref<32x1xf32, #tpu.memory_space<vmem>>, %arg3: memref<1xf32, #tpu.memory_space<smem>>, %arg4: memref<1x8xf32, #tpu.memory_space<vmem>>) attributes {dimension_semantics = [#tpu.dimension_semantics<parallel>], iteration_bounds = array<i64: 1>, scalar_prefetch = 0 : i64, scratch_operands = 0 : i64, tpu.core_type = #tpu.core_type<tc>, window_params = [{transform_indices = @transform_0, window_bounds = array<i64: 32, 8>}, {pipeline_mode = #tpu.pipeline_mode<synchronous>, transform_indices = @transform_1, window_bounds = array<i64: 32, 1>}, {transform_indices = @transform_2, window_bounds = array<i64: 1>}, {transform_indices = @transform_3, window_bounds = array<i64: 1, 8>}]} {
    %c0 = arith.constant 0 : index
    %c0_0 = arith.constant 0 : index
    %0 = vector.load %arg1[%c0, %c0_0] : memref<32x8xf32, #tpu.memory_space<vmem>>, vector<32x8xf32>
    %c0_1 = arith.constant 0 : index
    %c0_2 = arith.constant 0 : index
    %1 = vector.load %arg2[%c0_1, %c0_2] : memref<32x1xf32, #tpu.memory_space<vmem>>, vector<32x1xf32>
    %c0_3 = arith.constant 0 : index
    %2 = memref.load %arg3[%c0_3] : memref<1xf32, #tpu.memory_space<smem>>
    %3 = vector.broadcast %1 : vector<32x1xf32> to vector<32x8xf32>
    %4 = arith.mulf %0, %3 : vector<32x8xf32>
    %cst = arith.constant dense<0.000000e+00> : vector<8xf32>
    %5 = vector.multi_reduction <add>, %4, %cst [0] : vector<32x8xf32> to vector<8xf32>
    %6 = vector.shape_cast %5 : vector<8xf32> to vector<1x8xf32>
    %7 = vector.broadcast %2 : f32 to vector<1x8xf32>
    %8 = arith.addf %6, %7 : vector<1x8xf32>
    %cst_4 = arith.constant 0.000000e+00 : f32
    %9 = vector.broadcast %cst_4 : f32 to vector<1x8xf32>
    %10 = arith.subf %9, %8 : vector<1x8xf32>
    %11 = math.exp %10 : vector<1x8xf32>
    %cst_5 = arith.constant 1.000000e+00 : f32
    %12 = vector.broadcast %cst_5 : f32 to vector<1x8xf32>
    %13 = arith.addf %12, %11 : vector<1x8xf32>
    %cst_6 = arith.constant 1.000000e+00 : f32
    %14 = vector.broadcast %cst_6 : f32 to vector<1x8xf32>
    %15 = arith.divf %14, %13 : vector<1x8xf32>
    %c0_7 = arith.constant 0 : index
    %c0_8 = arith.constant 0 : index
    %16 = vector.load %arg4[%c0_7, %c0_8] : memref<1x8xf32, #tpu.memory_space<vmem>>, vector<1x8xf32>
    tpu.vector_store %arg4[%c0_7, %c0_8], %15 {strides = array<i32>} : memref<1x8xf32, #tpu.memory_space<vmem>>, vector<1x8xf32>,
    return
  }
  func.func @transform_0(%arg0: i32) -> (i32, i32) {
    %c0_i32 = arith.constant 0 : i32
    %c0_i32_0 = arith.constant 0 : i32
    return %c0_i32, %arg0 : i32, i32
  }
  func.func @transform_1(%arg0: i32) -> (i32, i32) {
    %c0_i32 = arith.constant 0 : i32
    %c0_i32_0 = arith.constant 0 : i32
    %c0_i32_1 = arith.constant 0 : i32
    return %c0_i32, %c0_i32_0 : i32, i32
  }
  func.func @transform_2(%arg0: i32) -> i32 {
    %c0_i32 = arith.constant 0 : i32
    %c0_i32_0 = arith.constant 0 : i32
    return %c0_i32 : i32
  }
  func.func @transform_3(%arg0: i32) -> (i32, i32) {
    %c0_i32 = arith.constant 0 : i32
    %c0_i32_0 = arith.constant 0 : i32
    return %c0_i32, %arg0 : i32, i32
  }
}

</mosaic_0001>

<llo_original>
// kernel: tpu_custom_call.1
$region0: #{tpu_custom_call.1}
  #allocation0 [shape = 'u32[]', space=smem, size = 0x4, offset = 0x4, fixed_abs, tag = 'smem constant byte address 0x4 - core index']
  #allocation1 [shape = 'u32[144,128]{1,0:T(1,128)}', space=vmem, size = 0x12000, scoped, tag = 'internal scratch']
  #allocation2 [shape = 'f32[1]{0:T(128)S(6)}', space=smem, size = 0x200, scoped, tag = 'scoped memory for tpu_custom_call.1']
  %s0 = inlined_call_operand.vmem [shape: f32[32,8], index: 0, kind: input, shape index: {}]
  %s1 = inlined_call_operand.vmem [shape: f32[32,1], index: 1, kind: input, shape index: {}]
  %s2 = inlined_call_operand.<no memory space> [shape: f32[1], index: 2, kind: input, shape index: {}]
  %s3 = inlined_call_operand.hbm [shape: f32[1,8], index: 3, kind: output, shape index: {}]
  %s4 = sld [smem:[#allocation0]]
  $region22: #{tpu_custom_call.1} parent=0
    _
  %s6 = ssub.s32 1, %s4
  %s7 = scalar_select 0, %s6, %s4
  %8 = sst [smem:[#allocation2]] %s2
  $region1: #{tpu_custom_call.1} parent=0
    #allocation3 [shape = 'u8[512]{0}', space=vmem, size = 0x400, scoped, tag = 'output window, operand 0, single buffered']
    #allocation4 [shape = 's32[1]{0}', space=sflag, size = 0x4, scoped, tag = 'scoped memory for tpu_custom_call.1']
    %9 = vsyncpa [#allocation4], 0
    // Predicated region
    $region2: #{tpu_custom_call.1} parent=1 // pred_check
      _
    $region3: #{tpu_custom_call.1} parent=1 // pred_check_branch
      %11 = sbr.rel (0) target = $region5
    $region4: #{tpu_custom_call.1} parent=1 // pred_region
      _
    $region5: #{tpu_custom_call.1} parent=1 // pred_fallthru
      _
    // Predicated region
    $region6: #{tpu_custom_call.1} parent=1 // pred_check
      _
    $region7: #{tpu_custom_call.1} parent=1 // pred_check_branch
      %13 = sbr.rel (0) target = $region9
    $region8: #{tpu_custom_call.1} parent=1 // pred_region
      _
    $region9: #{tpu_custom_call.1} parent=1 // pred_fallthru
      _
    // Predicated region
    $region10: #{tpu_custom_call.1} parent=1 // pred_check
      _
    $region11: #{tpu_custom_call.1} parent=1 // pred_check_branch
      %15 = sbr.rel (0) target = $region13
    $region12: #{tpu_custom_call.1} parent=1 // pred_region
      _
    $region13: #{tpu_custom_call.1} parent=1 // pred_fallthru
      _
    %v16 = vld [vmem:[%s0] sm:$0xff]
    %v17 = vld [vmem:[%s0 + $0x8] sm:$0xff]
    %v18 = vld [vmem:[%s0 + $0x10] sm:$0xff]
    %v19 = vld [vmem:[%s0 + $0x18] sm:$0xff]
    %v20 = vld [vmem:[%s1] sm:$0xff]
    %v21 = vld [vmem:[%s1 + $0x8] sm:$0xff]
    %v22 = vld [vmem:[%s1 + $0x10] sm:$0xff]
    %v23 = vld [vmem:[%s1 + $0x18] sm:$0xff]
    %s24 = sld [smem:[#allocation2]]
    %26 = vset.pattern.permute.xlu0 0
    %27 = vperm.xlu0 %26, %v20
    %v28 = vpop.permute.xlu0 %27
    %31 = vset.pattern.permute.xlu0 0
    %32 = vperm.xlu0 %31, %v21
    %v33 = vpop.permute.xlu0 %32
    %36 = vset.pattern.permute.xlu0 0
    %37 = vperm.xlu0 %36, %v22
    %v38 = vpop.permute.xlu0 %37
    %41 = vset.pattern.permute.xlu0 0
    %42 = vperm.xlu0 %41, %v23
    %v43 = vpop.permute.xlu0 %42
    %v45 = vmul.f32 %v16, %v28
    %v46 = vmul.f32 %v17, %v33
    %v47 = vmul.f32 %v18, %v38
    %v48 = vmul.f32 %v19, %v43
    %vm49 = vcmask 64512
    %v50 = vsel %vm49, %v45, 0.0
    %v51 = vsel %vm49, %v46, 0.0
    %v52 = vadd.f32 %v50, %v51
    %v53 = vsel %vm49, %v47, 0.0
    %v54 = vadd.f32 %v52, %v53
    %v55 = vsel %vm49, %v48, 0.0
    %v56 = vadd.f32 %v54, %v55
    %v57 = vrot.slane %v56, 4
    %v58 = vadd.f32 %v56, %v57
    %v59 = vrot.slane %v58, 2
    %v60 = vadd.f32 %v58, %v59
    %v61 = vrot.slane %v60, 1
    %v62 = vadd.f32 %v60, %v61
    %v63 = vstv %s24
    %v64 = vadd.f32 %v62, %v63
    %v65 = vsub.f32 0.0, %v64
    %v66 = vmul.f32 %v65, 1.442695
    %v67 = vpow.pop %v66
    %v68 = vadd.f32 %v67, 1.0
    %v69 = vrcp.pop %v68
    %v70 = vmul.f32 1.0, %v69
    %vm71 = vcmask 57344
    %72 = vst.msk [vmem:[#allocation3] sm:$0x1] %vm71, %v70
    // Predicated region
    $region14: #{tpu_custom_call.1} parent=1 // pred_check
      _
    $region15: #{tpu_custom_call.1} parent=1 // pred_check_branch
      %74 = sbr.rel (0) target = $region17
    $region16: #{tpu_custom_call.1} parent=1 // pred_region
      %s76 = ssub.s32 16, 16
      %77 = vsyncadd [#allocation4], %s76
      %s79 = sshll.u32 [#allocation3], 4
      %s80 = int_to_ptr.vmem [resolvable:$true] %s79
      %82 = dma.vmem_to_hbm [thread:$0]  %s80, 16, %s3, [#allocation4]
    $region17: #{tpu_custom_call.1} parent=1 // pred_fallthru
      _
    // Predicated region
    $region18: #{tpu_custom_call.1} parent=1 // pred_check
      _
    $region19: #{tpu_custom_call.1} parent=1 // pred_check_branch
      %84 = sbr.rel (0) target = $region21
    $region20: #{tpu_custom_call.1} parent=1 // pred_region
      %85 = dma.done [#allocation4], 16
    $region21: #{tpu_custom_call.1} parent=1 // pred_fallthru
      _
    %86 = vsyncpa [#allocation4], 1

</llo_original>
